<compile_context>
chip_gen: v7x
topology: tpu7x:2x2x1
jax: 0.10.0
libtpu: 0.0.40
codegen_flags: <defaults>
</compile_context>

<pallas_src>
import functools

import jax
import jax.numpy as jnp
from jax.experimental import pallas as pl
from jax.experimental.pallas import tpu as pltpu

LANE = 128
MAX_TILE_ROWS = 8192                   # 8192 * 128 * 4 B = 4 MiB per f32 input tile
VMEM_LIMIT_BYTES = 32 * 1024 * 1024    # > v5e's 16 MiB default, <= every chip's physical VMEM
NEUTRAL_LOGIT = -1e4                   # sigmoid(-1e4)==0 and bce(-1e4, 0)==0 exactly in f32


def _num_tensorcores() -> int:
    """Best-effort TensorCores per chip: 2 on v7x, else 1 (v5e/v6e)."""
    try:
        kind = jax.devices()[0].device_kind.lower()
    except Exception:
        return 1
    if "v7" in kind or "tpu7" in kind:
        return 2
    return 1


def _bce_dice_partials_kernel(x_ref, t_ref, out_ref, *,
                              tile_rows, rows, steps_per_core):
    """Accumulate per-core vector partial sums for BCE-with-logits + Dice.

    x_ref, t_ref: (tile_rows, LANE) VMEM tiles (native dtype, upcast in-kernel).
    out_ref:      (4, 8, LANE) f32 block, resident across the inner ("arbitrary")
                  grid axis -> per-core accumulator.
                  rows of out_ref: [sum(p*t), sum(p), sum(t), sum(bce)]
    """
    c = pl.program_id(0)
    j = pl.program_id(1)

    @pl.when(j == 0)
    def _init():
        out_ref[...] = jnp.zeros_like(out_ref)

    g = c * steps_per_core + j            # unclamped global block id
    row0 = g * tile_rows
    is_interior = row0 + tile_rows <= rows

    def fold(v):
        # (tile_rows, LANE) -> (8, LANE): vreg-aligned VPU adds (tile_rows % 8 == 0).
        return v.reshape(tile_rows // 8, 8, LANE).sum(axis=0)

    def accumulate(x, t):
        # One exp per element; 1+e shared by sigmoid and the stable BCE log term.
        e = jnp.exp(-jnp.abs(x))
        one_plus_e = 1.0 + e
        r = pl.reciprocal(one_plus_e, approx=False)
        p = jnp.where(x >= 0, r, e * r)                    # sigmoid(x)
        # Numerically stable BCE-with-logits (PyTorch formulation):
        #   max(x, 0) - x*t + log(1 + exp(-|x|))
        bce = jnp.maximum(x, 0.0) - x * t + jnp.log(one_plus_e)
        out_ref[0] += fold(p * t)
        out_ref[1] += fold(p)
        out_ref[2] += fold(t)
        out_ref[3] += fold(bce)

    @pl.when(is_interior)
    def _interior():
        # Steady-state path: no masking ops.
        accumulate(x_ref[...].astype(jnp.float32), t_ref[...].astype(jnp.float32))

    @pl.when(jnp.logical_not(is_interior))
    def _tail():
        # Last / duplicated (index-clamped) block: mask rows past the logical end.
        x = x_ref[...].astype(jnp.float32)
        t = t_ref[...].astype(jnp.float32)
        row_ids = jax.lax.broadcasted_iota(jnp.int32, (tile_rows, LANE), 0)
        valid = (row_ids + row0) < rows
        accumulate(jnp.where(valid, x, jnp.float32(NEUTRAL_LOGIT)),
                   jnp.where(valid, t, jnp.float32(0.0)))


def _partial_sums_jax(x, t):
    """Tiny tail path (< 8*128 elements) computed directly in JAX."""
    x = x.astype(jnp.float32)
    t = t.astype(jnp.float32)
    e = jnp.exp(-jnp.abs(x))
    p = jnp.where(x >= 0, 1.0, e) / (1.0 + e)
    bce = jnp.maximum(x, 0.0) - x * t + jnp.log1p(e)
    return jnp.sum(p * t), jnp.sum(p), jnp.sum(t), jnp.sum(bce)


def _sublane_multiple(dtype) -> int:
    # Dense sublane tiling requirement for the streamed (native) dtype.
    return {4: 8, 2: 16, 1: 32}.get(jnp.dtype(dtype).itemsize, 8)


@functools.partial(jax.jit, static_argnames=("eps",))
def bce_dice_loss(logits, targets, eps=1e-9):
    assert logits.shape == targets.shape
    n_total = logits.size

    # Keep inputs in their native dtype in HBM (bf16/int8 stream at half/quarter
    # the bytes); the kernel upcasts each tile to f32 in VMEM.
    x_flat = logits.reshape(-1)
    t_flat = targets.reshape(-1)

    row_mult = max(_sublane_multiple(logits.dtype), _sublane_multiple(targets.dtype))
    rows = (n_total // (LANE * row_mult)) * row_mult
    n_main = rows * LANE

    sum_pt = jnp.float32(0.0)
    sum_p = jnp.float32(0.0)
    sum_t = jnp.float32(0.0)
    bce_sum = jnp.float32(0.0)

    if rows > 0:
        x2 = (x_flat if n_main == n_total else x_flat[:n_main]).reshape(rows, LANE)
        t2 = (t_flat if n_main == n_total else t_flat[:n_main]).reshape(rows, LANE)

        tile_rows = rows if rows <= MAX_TILE_ROWS else MAX_TILE_ROWS
        num_blocks = -(-rows // tile_rows)
        num_cores = min(_num_tensorcores(), num_blocks)
        steps_per_core = -(-num_blocks // num_cores)

        def in_index(c, j):
            # Clamp so duplicate / tail work items still DMA a valid block; their
            # contribution is masked to zero inside the kernel's tail branch.
            return (jnp.minimum(c * steps_per_core + j, num_blocks - 1), 0)

        tile_spec = pl.BlockSpec((tile_rows, LANE), in_index)

        kernel = functools.partial(
            _bce_dice_partials_kernel,
            tile_rows=tile_rows, rows=rows, steps_per_core=steps_per_core)

        arb = getattr(pltpu, "ARBITRARY", "arbitrary")
        core_par = getattr(pltpu, "CORE_PARALLEL", "parallel")
        dims = (core_par if num_cores > 1 else arb, arb)

        partials = pl.pallas_call(
            kernel,
            out_shape=jax.ShapeDtypeStruct((num_cores, 4, 8, LANE), jnp.float32),
            grid_spec=pltpu.PrefetchScalarGridSpec(
                num_scalar_prefetch=0,
                grid=(num_cores, steps_per_core),
                in_specs=[tile_spec, tile_spec],
                out_specs=pl.BlockSpec((None, 4, 8, LANE),
                                       lambda c, j: (c, 0, 0, 0)),
            ),
            compiler_params=pltpu.CompilerParams(
                dimension_semantics=dims,
                vmem_limit_bytes=VMEM_LIMIT_BYTES),
        )(x2, t2)

        sums = jnp.sum(partials, axis=(0, 2, 3))
        sum_pt, sum_p, sum_t, bce_sum = sums[0], sums[1], sums[2], sums[3]

    if n_main != n_total:
        # < 8*128 leftover elements: plain-JAX epilogue, no HBM pad copy.
        tpt, tp, tt, tb = _partial_sums_jax(x_flat[n_main:], t_flat[n_main:])
        sum_pt = sum_pt + tpt
        sum_p = sum_p + tp
        sum_t = sum_t + tt
        bce_sum = bce_sum + tb

    # Matches the PyTorch module: eps only on the Dice numerator.
    dice_loss = 1.0 - (2.0 * sum_pt + eps) / (sum_p + sum_t)
    bce_loss = bce_sum / jnp.float32(n_total)
    return bce_loss + dice_loss


def _reference(logits, targets, eps=1e-9):
    """Pure-JAX reference matching the PyTorch BCEDiceLoss module."""
    x = logits.astype(jnp.float32)
    t = targets.astype(jnp.float32)
    p = jax.nn.sigmoid(x)
    intersection = 2.0 * jnp.sum(p * t)
    union = jnp.sum(p) + jnp.sum(t)
    dice_loss = 1.0 - (intersection + eps) / union
    bce = jnp.maximum(x, 0.0) - x * t + jnp.log1p(jnp.exp(-jnp.abs(x)))
    return jnp.mean(bce) + dice_loss


if __name__ == "__main__":
    key = jax.random.PRNGKey(0)
    k1, k2 = jax.random.split(key)
    # NCHW-shaped inputs, as the PyTorch module would see them.
    logits = jax.random.normal(k1, (2, 4, 16, 16), dtype=jnp.float32)
    targets = (jax.random.uniform(k2, (2, 4, 16, 16)) > 0.5).astype(jnp.float32)

    out = bce_dice_loss(logits, targets)
    out = jax.block_until_ready(out)

    ref = _reference(logits, targets)
    assert jnp.allclose(out, ref, rtol=1e-4, atol=1e-5), (out, ref)

    print("KERNEL_OK")
</pallas_src>

<mosaic_0001>
module attributes {stable_mosaic.version = 11 : i64} {
  func.func @_bce_dice_partials_kernel(%arg0: i32, %arg1: i32, %arg2: memref<16x128xf32, #tpu.memory_space<vmem>>, %arg3: memref<16x128xf32, #tpu.memory_space<vmem>>, %arg4: memref<1x4x8x128xf32, #tpu.memory_space<vmem>>) attributes {dimension_semantics = [#tpu.dimension_semantics<arbitrary>, #tpu.dimension_semantics<arbitrary>], iteration_bounds = array<i64: 1, 1>, scalar_prefetch = 0 : i64, scratch_operands = 0 : i64, tpu.core_type = #tpu.core_type<tc>, window_params = [{transform_indices = @transform_0, window_bounds = array<i64: 16, 128>}, {transform_indices = @transform_1, window_bounds = array<i64: 16, 128>}, {transform_indices = @transform_2, window_bounds = array<i64: 1, 4, 8, 128>}]} {
    %c0_i32 = arith.constant 0 : i32
    %0 = arith.cmpi eq, %arg1, %c0_i32 : i32
    %1 = arith.extui %0 : i1 to i32
    %c0_i32_0 = arith.constant 0 : i32
    %2 = arith.cmpi ne, %1, %c0_i32_0 : i32
    scf.if %2 {
      %cst = arith.constant 0.000000e+00 : f32
      %13 = vector.broadcast %cst : f32 to vector<4x8x128xf32>
      %c0 = arith.constant 0 : index
      %c0_5 = arith.constant 0 : index
      %c0_6 = arith.constant 0 : index
      %c0_7 = arith.constant 0 : index
      %14 = vector.load %arg4[%c0, %c0_5, %c0_6, %c0_7] : memref<1x4x8x128xf32, #tpu.memory_space<vmem>>, vector<1x4x8x128xf32>
      %15 = vector.shape_cast %14 : vector<1x4x8x128xf32> to vector<4x8x128xf32>
      %16 = vector.shape_cast %13 : vector<4x8x128xf32> to vector<1x4x8x128xf32>
      tpu.vector_store %arg4[%c0, %c0_5, %c0_6, %c0_7], %16 {strides = array<i32>} : memref<1x4x8x128xf32, #tpu.memory_space<vmem>>, vector<1x4x8x128xf32>,
    } else {
    }
    %c1_i32 = arith.constant 1 : i32
    %3 = arith.muli %arg0, %c1_i32 : i32
    %4 = arith.addi %3, %arg1 : i32
    %c16_i32 = arith.constant 16 : i32
    %5 = arith.muli %4, %c16_i32 : i32
    %c16_i32_1 = arith.constant 16 : i32
    %6 = arith.addi %5, %c16_i32_1 : i32
    %c16_i32_2 = arith.constant 16 : i32
    %7 = arith.cmpi sle, %6, %c16_i32_2 : i32
    %8 = arith.extui %7 : i1 to i32
    %c0_i32_3 = arith.constant 0 : i32
    %9 = arith.cmpi ne, %8, %c0_i32_3 : i32
    scf.if %9 {
      %c0 = arith.constant 0 : index
      %c0_5 = arith.constant 0 : index
      %13 = vector.load %arg2[%c0, %c0_5] : memref<16x128xf32, #tpu.memory_space<vmem>>, vector<16x128xf32>
      %c0_6 = arith.constant 0 : index
      %c0_7 = arith.constant 0 : index
      %14 = vector.load %arg3[%c0_6, %c0_7] : memref<16x128xf32, #tpu.memory_space<vmem>>, vector<16x128xf32>
      %15 = math.absf %13 : vector<16x128xf32>
      %cst = arith.constant 0.000000e+00 : f32
      %16 = vector.broadcast %cst : f32 to vector<16x128xf32>
      %17 = arith.subf %16, %15 : vector<16x128xf32>
      %18 = math.exp %17 : vector<16x128xf32>
      %cst_8 = arith.constant 1.000000e+00 : f32
      %19 = vector.broadcast %cst_8 : f32 to vector<16x128xf32>
      %20 = arith.addf %19, %18 : vector<16x128xf32>
      %21 = tpu.reciprocal %20 : vector<16x128xf32> -> vector<16x128xf32>
      %cst_9 = arith.constant 0.000000e+00 : f32
      %22 = vector.broadcast %cst_9 : f32 to vector<16x128xf32>
      %23 = arith.cmpf oge, %13, %22 : vector<16x128xf32>
      %24 = arith.mulf %18, %21 : vector<16x128xf32>
      %25 = arith.select %23, %21, %24 : vector<16x128xi1>, vector<16x128xf32>
      %cst_10 = arith.constant 0.000000e+00 : f32
      %26 = vector.broadcast %cst_10 : f32 to vector<16x128xf32>
      %27 = arith.maximumf %13, %26 : vector<16x128xf32>
      %28 = arith.mulf %13, %14 : vector<16x128xf32>
      %29 = arith.subf %27, %28 : vector<16x128xf32>
      %30 = math.log %20 : vector<16x128xf32>
      %31 = arith.addf %29, %30 : vector<16x128xf32>
      %c0_11 = arith.constant 0 : index
      %c0_12 = arith.constant 0 : index
      %c0_13 = arith.constant 0 : index
      %c0_14 = arith.constant 0 : index
      %32 = vector.load %arg4[%c0_11, %c0_12, %c0_13, %c0_14] : memref<1x4x8x128xf32, #tpu.memory_space<vmem>>, vector<1x1x8x128xf32>
      %33 = vector.shape_cast %32 : vector<1x1x8x128xf32> to vector<8x128xf32>
      %34 = arith.mulf %25, %14 : vector<16x128xf32>
      %35 = vector.shape_cast %34 : vector<16x128xf32> to vector<2x8x128xf32>
      %cst_15 = arith.constant dense<0.000000e+00> : vector<8x128xf32>
      %36 = vector.multi_reduction <add>, %35, %cst_15 [0] : vector<2x8x128xf32> to vector<8x128xf32>
      %37 = arith.addf %33, %36 : vector<8x128xf32>
      %c0_16 = arith.constant 0 : index
      %c0_17 = arith.constant 0 : index
      %c0_18 = arith.constant 0 : index
      %c0_19 = arith.constant 0 : index
      %38 = vector.load %arg4[%c0_16, %c0_17, %c0_18, %c0_19] : memref<1x4x8x128xf32, #tpu.memory_space<vmem>>, vector<1x1x8x128xf32>
      %39 = vector.shape_cast %38 : vector<1x1x8x128xf32> to vector<8x128xf32>
      %40 = vector.shape_cast %37 : vector<8x128xf32> to vector<1x1x8x128xf32>
      tpu.vector_store %arg4[%c0_16, %c0_17, %c0_18, %c0_19], %40 {strides = array<i32>} : memref<1x4x8x128xf32, #tpu.memory_space<vmem>>, vector<1x1x8x128xf32>,
      %c0_20 = arith.constant 0 : index
      %c1 = arith.constant 1 : index
      %c0_21 = arith.constant 0 : index
      %c0_22 = arith.constant 0 : index
      %41 = vector.load %arg4[%c0_20, %c1, %c0_21, %c0_22] : memref<1x4x8x128xf32, #tpu.memory_space<vmem>>, vector<1x1x8x128xf32>
      %42 = vector.shape_cast %41 : vector<1x1x8x128xf32> to vector<8x128xf32>
      %43 = vector.shape_cast %25 : vector<16x128xf32> to vector<2x8x128xf32>
      %cst_23 = arith.constant dense<0.000000e+00> : vector<8x128xf32>
      %44 = vector.multi_reduction <add>, %43, %cst_23 [0] : vector<2x8x128xf32> to vector<8x128xf32>
      %45 = arith.addf %42, %44 : vector<8x128xf32>
      %c0_24 = arith.constant 0 : index
      %c1_25 = arith.constant 1 : index
      %c0_26 = arith.constant 0 : index
      %c0_27 = arith.constant 0 : index
      %46 = vector.load %arg4[%c0_24, %c1_25, %c0_26, %c0_27] : memref<1x4x8x128xf32, #tpu.memory_space<vmem>>, vector<1x1x8x128xf32>
      %47 = vector.shape_cast %46 : vector<1x1x8x128xf32> to vector<8x128xf32>
      %48 = vector.shape_cast %45 : vector<8x128xf32> to vector<1x1x8x128xf32>
      tpu.vector_store %arg4[%c0_24, %c1_25, %c0_26, %c0_27], %48 {strides = array<i32>} : memref<1x4x8x128xf32, #tpu.memory_space<vmem>>, vector<1x1x8x128xf32>,
      %c0_28 = arith.constant 0 : index
      %c2 = arith.constant 2 : index
      %c0_29 = arith.constant 0 : index
      %c0_30 = arith.constant 0 : index
      %49 = vector.load %arg4[%c0_28, %c2, %c0_29, %c0_30] : memref<1x4x8x128xf32, #tpu.memory_space<vmem>>, vector<1x1x8x128xf32>
      %50 = vector.shape_cast %49 : vector<1x1x8x128xf32> to vector<8x128xf32>
      %51 = vector.shape_cast %14 : vector<16x128xf32> to vector<2x8x128xf32>
      %cst_31 = arith.constant dense<0.000000e+00> : vector<8x128xf32>
      %52 = vector.multi_reduction <add>, %51, %cst_31 [0] : vector<2x8x128xf32> to vector<8x128xf32>
      %53 = arith.addf %50, %52 : vector<8x128xf32>
      %c0_32 = arith.constant 0 : index
      %c2_33 = arith.constant 2 : index
      %c0_34 = arith.constant 0 : index
      %c0_35 = arith.constant 0 : index
      %54 = vector.load %arg4[%c0_32, %c2_33, %c0_34, %c0_35] : memref<1x4x8x128xf32, #tpu.memory_space<vmem>>, vector<1x1x8x128xf32>
      %55 = vector.shape_cast %54 : vector<1x1x8x128xf32> to vector<8x128xf32>
      %56 = vector.shape_cast %53 : vector<8x128xf32> to vector<1x1x8x128xf32>
      tpu.vector_store %arg4[%c0_32, %c2_33, %c0_34, %c0_35], %56 {strides = array<i32>} : memref<1x4x8x128xf32, #tpu.memory_space<vmem>>, vector<1x1x8x128xf32>,
      %c0_36 = arith.constant 0 : index
      %c3 = arith.constant 3 : index
      %c0_37 = arith.constant 0 : index
      %c0_38 = arith.constant 0 : index
      %57 = vector.load %arg4[%c0_36, %c3, %c0_37, %c0_38] : memref<1x4x8x128xf32, #tpu.memory_space<vmem>>, vector<1x1x8x128xf32>
      %58 = vector.shape_cast %57 : vector<1x1x8x128xf32> to vector<8x128xf32>
      %59 = vector.shape_cast %31 : vector<16x128xf32> to vector<2x8x128xf32>
      %cst_39 = arith.constant dense<0.000000e+00> : vector<8x128xf32>
      %60 = vector.multi_reduction <add>, %59, %cst_39 [0] : vector<2x8x128xf32> to vector<8x128xf32>
      %61 = arith.addf %58, %60 : vector<8x128xf32>
      %c0_40 = arith.constant 0 : index
      %c3_41 = arith.constant 3 : index
      %c0_42 = arith.constant 0 : index
      %c0_43 = arith.constant 0 : index
      %62 = vector.load %arg4[%c0_40, %c3_41, %c0_42, %c0_43] : memref<1x4x8x128xf32, #tpu.memory_space<vmem>>, vector<1x1x8x128xf32>
      %63 = vector.shape_cast %62 : vector<1x1x8x128xf32> to vector<8x128xf32>
      %64 = vector.shape_cast %61 : vector<8x128xf32> to vector<1x1x8x128xf32>
      tpu.vector_store %arg4[%c0_40, %c3_41, %c0_42, %c0_43], %64 {strides = array<i32>} : memref<1x4x8x128xf32, #tpu.memory_space<vmem>>, vector<1x1x8x128xf32>,
    } else {
    }
    %true = arith.constant true
    %10 = arith.xori %7, %true : i1
    %11 = arith.extui %10 : i1 to i32
    %c0_i32_4 = arith.constant 0 : i32
    %12 = arith.cmpi ne, %11, %c0_i32_4 : i32
    scf.if %12 {
      %c0 = arith.constant 0 : index
      %c0_5 = arith.constant 0 : index
      %13 = vector.load %arg2[%c0, %c0_5] : memref<16x128xf32, #tpu.memory_space<vmem>>, vector<16x128xf32>
      %c0_6 = arith.constant 0 : index
      %c0_7 = arith.constant 0 : index
      %14 = vector.load %arg3[%c0_6, %c0_7] : memref<16x128xf32, #tpu.memory_space<vmem>>, vector<16x128xf32>
      %15 = tpu.iota {dimensions = array<i32: 0>} : vector<16x128xi32>
      %16 = vector.broadcast %5 : i32 to vector<16x128xi32>
      %17 = arith.addi %15, %16 : vector<16x128xi32>
      %c16_i32_8 = arith.constant 16 : i32
      %18 = vector.broadcast %c16_i32_8 : i32 to vector<16x128xi32>
      %19 = arith.cmpi slt, %17, %18 : vector<16x128xi32>
      %cst = arith.constant -1.000000e+04 : f32
      %20 = vector.broadcast %cst : f32 to vector<16x128xf32>
      %21 = arith.select %19, %13, %20 : vector<16x128xi1>, vector<16x128xf32>
      %cst_9 = arith.constant 0.000000e+00 : f32
      %22 = vector.broadcast %cst_9 : f32 to vector<16x128xf32>
      %23 = arith.select %19, %14, %22 : vector<16x128xi1>, vector<16x128xf32>
      %24 = math.absf %21 : vector<16x128xf32>
      %cst_10 = arith.constant 0.000000e+00 : f32
      %25 = vector.broadcast %cst_10 : f32 to vector<16x128xf32>
      %26 = arith.subf %25, %24 : vector<16x128xf32>
      %27 = math.exp %26 : vector<16x128xf32>
      %cst_11 = arith.constant 1.000000e+00 : f32
      %28 = vector.broadcast %cst_11 : f32 to vector<16x128xf32>
      %29 = arith.addf %28, %27 : vector<16x128xf32>
      %30 = tpu.reciprocal %29 : vector<16x128xf32> -> vector<16x128xf32>
      %cst_12 = arith.constant 0.000000e+00 : f32
      %31 = vector.broadcast %cst_12 : f32 to vector<16x128xf32>
      %32 = arith.cmpf oge, %21, %31 : vector<16x128xf32>
      %33 = arith.mulf %27, %30 : vector<16x128xf32>
      %34 = arith.select %32, %30, %33 : vector<16x128xi1>, vector<16x128xf32>
      %cst_13 = arith.constant 0.000000e+00 : f32
      %35 = vector.broadcast %cst_13 : f32 to vector<16x128xf32>
      %36 = arith.maximumf %21, %35 : vector<16x128xf32>
      %37 = arith.mulf %21, %23 : vector<16x128xf32>
      %38 = arith.subf %36, %37 : vector<16x128xf32>
      %39 = math.log %29 : vector<16x128xf32>
      %40 = arith.addf %38, %39 : vector<16x128xf32>
      %c0_14 = arith.constant 0 : index
      %c0_15 = arith.constant 0 : index
      %c0_16 = arith.constant 0 : index
      %c0_17 = arith.constant 0 : index
      %41 = vector.load %arg4[%c0_14, %c0_15, %c0_16, %c0_17] : memref<1x4x8x128xf32, #tpu.memory_space<vmem>>, vector<1x1x8x128xf32>
      %42 = vector.shape_cast %41 : vector<1x1x8x128xf32> to vector<8x128xf32>
      %43 = arith.mulf %34, %23 : vector<16x128xf32>
      %44 = vector.shape_cast %43 : vector<16x128xf32> to vector<2x8x128xf32>
      %cst_18 = arith.constant dense<0.000000e+00> : vector<8x128xf32>
      %45 = vector.multi_reduction <add>, %44, %cst_18 [0] : vector<2x8x128xf32> to vector<8x128xf32>
      %46 = arith.addf %42, %45 : vector<8x128xf32>
      %c0_19 = arith.constant 0 : index
      %c0_20 = arith.constant 0 : index
      %c0_21 = arith.constant 0 : index
      %c0_22 = arith.constant 0 : index
      %47 = vector.load %arg4[%c0_19, %c0_20, %c0_21, %c0_22] : memref<1x4x8x128xf32, #tpu.memory_space<vmem>>, vector<1x1x8x128xf32>
      %48 = vector.shape_cast %47 : vector<1x1x8x128xf32> to vector<8x128xf32>
      %49 = vector.shape_cast %46 : vector<8x128xf32> to vector<1x1x8x128xf32>
      tpu.vector_store %arg4[%c0_19, %c0_20, %c0_21, %c0_22], %49 {strides = array<i32>} : memref<1x4x8x128xf32, #tpu.memory_space<vmem>>, vector<1x1x8x128xf32>,
      %c0_23 = arith.constant 0 : index
      %c1 = arith.constant 1 : index
      %c0_24 = arith.constant 0 : index
      %c0_25 = arith.constant 0 : index
      %50 = vector.load %arg4[%c0_23, %c1, %c0_24, %c0_25] : memref<1x4x8x128xf32, #tpu.memory_space<vmem>>, vector<1x1x8x128xf32>
      %51 = vector.shape_cast %50 : vector<1x1x8x128xf32> to vector<8x128xf32>
      %52 = vector.shape_cast %34 : vector<16x128xf32> to vector<2x8x128xf32>
      %cst_26 = arith.constant dense<0.000000e+00> : vector<8x128xf32>
      %53 = vector.multi_reduction <add>, %52, %cst_26 [0] : vector<2x8x128xf32> to vector<8x128xf32>
      %54 = arith.addf %51, %53 : vector<8x128xf32>
      %c0_27 = arith.constant 0 : index
      %c1_28 = arith.constant 1 : index
      %c0_29 = arith.constant 0 : index
      %c0_30 = arith.constant 0 : index
      %55 = vector.load %arg4[%c0_27, %c1_28, %c0_29, %c0_30] : memref<1x4x8x128xf32, #tpu.memory_space<vmem>>, vector<1x1x8x128xf32>
      %56 = vector.shape_cast %55 : vector<1x1x8x128xf32> to vector<8x128xf32>
      %57 = vector.shape_cast %54 : vector<8x128xf32> to vector<1x1x8x128xf32>
      tpu.vector_store %arg4[%c0_27, %c1_28, %c0_29, %c0_30], %57 {strides = array<i32>} : memref<1x4x8x128xf32, #tpu.memory_space<vmem>>, vector<1x1x8x128xf32>,
      %c0_31 = arith.constant 0 : index
      %c2 = arith.constant 2 : index
      %c0_32 = arith.constant 0 : index
      %c0_33 = arith.constant 0 : index
      %58 = vector.load %arg4[%c0_31, %c2, %c0_32, %c0_33] : memref<1x4x8x128xf32, #tpu.memory_space<vmem>>, vector<1x1x8x128xf32>
      %59 = vector.shape_cast %58 : vector<1x1x8x128xf32> to vector<8x128xf32>
      %60 = vector.shape_cast %23 : vector<16x128xf32> to vector<2x8x128xf32>
      %cst_34 = arith.constant dense<0.000000e+00> : vector<8x128xf32>
      %61 = vector.multi_reduction <add>, %60, %cst_34 [0] : vector<2x8x128xf32> to vector<8x128xf32>
      %62 = arith.addf %59, %61 : vector<8x128xf32>
      %c0_35 = arith.constant 0 : index
      %c2_36 = arith.constant 2 : index
      %c0_37 = arith.constant 0 : index
      %c0_38 = arith.constant 0 : index
      %63 = vector.load %arg4[%c0_35, %c2_36, %c0_37, %c0_38] : memref<1x4x8x128xf32, #tpu.memory_space<vmem>>, vector<1x1x8x128xf32>
      %64 = vector.shape_cast %63 : vector<1x1x8x128xf32> to vector<8x128xf32>
      %65 = vector.shape_cast %62 : vector<8x128xf32> to vector<1x1x8x128xf32>
      tpu.vector_store %arg4[%c0_35, %c2_36, %c0_37, %c0_38], %65 {strides = array<i32>} : memref<1x4x8x128xf32, #tpu.memory_space<vmem>>, vector<1x1x8x128xf32>,
      %c0_39 = arith.constant 0 : index
      %c3 = arith.constant 3 : index
      %c0_40 = arith.constant 0 : index
      %c0_41 = arith.constant 0 : index
      %66 = vector.load %arg4[%c0_39, %c3, %c0_40, %c0_41] : memref<1x4x8x128xf32, #tpu.memory_space<vmem>>, vector<1x1x8x128xf32>
      %67 = vector.shape_cast %66 : vector<1x1x8x128xf32> to vector<8x128xf32>
      %68 = vector.shape_cast %40 : vector<16x128xf32> to vector<2x8x128xf32>
      %cst_42 = arith.constant dense<0.000000e+00> : vector<8x128xf32>
      %69 = vector.multi_reduction <add>, %68, %cst_42 [0] : vector<2x8x128xf32> to vector<8x128xf32>
      %70 = arith.addf %67, %69 : vector<8x128xf32>
      %c0_43 = arith.constant 0 : index
      %c3_44 = arith.constant 3 : index
      %c0_45 = arith.constant 0 : index
      %c0_46 = arith.constant 0 : index
      %71 = vector.load %arg4[%c0_43, %c3_44, %c0_45, %c0_46] : memref<1x4x8x128xf32, #tpu.memory_space<vmem>>, vector<1x1x8x128xf32>
      %72 = vector.shape_cast %71 : vector<1x1x8x128xf32> to vector<8x128xf32>
      %73 = vector.shape_cast %70 : vector<8x128xf32> to vector<1x1x8x128xf32>
      tpu.vector_store %arg4[%c0_43, %c3_44, %c0_45, %c0_46], %73 {strides = array<i32>} : memref<1x4x8x128xf32, #tpu.memory_space<vmem>>, vector<1x1x8x128xf32>,
    } else {
    }
    return
  }
  func.func @transform_0(%arg0: i32, %arg1: i32) -> (i32, i32) {
    %c1_i32 = arith.constant 1 : i32
    %0 = arith.muli %arg0, %c1_i32 : i32
    %1 = arith.addi %0, %arg1 : i32
    %c0_i32 = arith.constant 0 : i32
    %2 = arith.minsi %1, %c0_i32 : i32
    %c0_i32_0 = arith.constant 0 : i32
    %c0_i32_1 = arith.constant 0 : i32
    return %2, %c0_i32_0 : i32, i32
  }
  func.func @transform_1(%arg0: i32, %arg1: i32) -> (i32, i32) {
    %c1_i32 = arith.constant 1 : i32
    %0 = arith.muli %arg0, %c1_i32 : i32
    %1 = arith.addi %0, %arg1 : i32
    %c0_i32 = arith.constant 0 : i32
    %2 = arith.minsi %1, %c0_i32 : i32
    %c0_i32_0 = arith.constant 0 : i32
    %c0_i32_1 = arith.constant 0 : i32
    return %2, %c0_i32_0 : i32, i32
  }
  func.func @transform_2(%arg0: i32, %arg1: i32) -> (i32, i32, i32, i32) {
    %c0_i32 = arith.constant 0 : i32
    %c0_i32_0 = arith.constant 0 : i32
    %c0_i32_1 = arith.constant 0 : i32
    %c0_i32_2 = arith.constant 0 : i32
    return %arg0, %c0_i32, %c0_i32_0, %c0_i32_1 : i32, i32, i32, i32
  }
}

</mosaic_0001>

<llo_original>
// kernel: bce_dice_loss.1
$region0: #{bce_dice_loss.1}
  #allocation0 [shape = 'u32[]', space=smem, size = 0x4, offset = 0x4, fixed_abs, tag = 'smem constant byte address 0x4 - core index']
  #allocation1 [shape = 'u32[144,128]{1,0:T(1,128)}', space=vmem, size = 0x12000, scoped, tag = 'internal scratch']
  %s0 = inlined_call_operand.vmem [shape: f32[16,128], index: 0, kind: input, shape index: {}]
  %s1 = inlined_call_operand.vmem [shape: f32[16,128], index: 1, kind: input, shape index: {}]
  %s2 = inlined_call_operand.vmem [shape: f32[1,4,8,128], index: 2, kind: output, shape index: {}]
  %s3 = sld [smem:[#allocation0]]
  $region30: #{bce_dice_loss.1} parent=0
    _
  %s5 = ssub.s32 1, %s3
  %s6 = scalar_select 0, %s5, %s3
  // Predicated region
  $region2: #{bce_dice_loss.1} parent=0 // pred_check
    _
  $region3: #{bce_dice_loss.1} parent=0 // pred_check_branch
    %8 = sbr.rel (0) target = $region5
  $region4: #{bce_dice_loss.1} parent=0 // pred_region
    %s9 = sadd.s32 0, 0
    %p10 = scmp.lt.s32.totalorder %s9, 0
    %s11 = scalar_select %p10, %s9, 0
    %s12 = smul.u32 2, %s11
    %p13 = scmp.lt.s32.totalorder %s12, 1
    %s14 = scalar_select %p13, %s12, 1
    %s15 = smul.addr %s14, 8
    %s16 = scalar_lea.vmem %s0, %s15
    %s17 = sadd.s32 0, 0
    %p18 = scmp.lt.s32.totalorder %s17, 0
    %s19 = scalar_select %p18, %s17, 0
    %s20 = smul.u32 2, %s19
  $region5: #{bce_dice_loss.1} parent=0 // pred_fallthru
    _
  // Predicated region
  $region6: #{bce_dice_loss.1} parent=0 // pred_check
    _
  $region7: #{bce_dice_loss.1} parent=0 // pred_check_branch
    %22 = sbr.rel (0) target = $region9
  $region8: #{bce_dice_loss.1} parent=0 // pred_region
    %s23 = sadd.s32 0, 0
    %p24 = scmp.lt.s32.totalorder %s23, 0
    %s25 = scalar_select %p24, %s23, 0
    %s26 = smul.u32 2, %s25
    %p27 = scmp.lt.s32.totalorder %s26, 1
    %s28 = scalar_select %p27, %s26, 1
    %s29 = smul.addr %s28, 8
    %s30 = scalar_lea.vmem %s1, %s29
    %s31 = sadd.s32 0, 0
    %p32 = scmp.lt.s32.totalorder %s31, 0
    %s33 = scalar_select %p32, %s31, 0
    %s34 = smul.u32 2, %s33
  $region9: #{bce_dice_loss.1} parent=0 // pred_fallthru
    _
  %s35 = sadd.s32 0, 0
  %p36 = scmp.lt.s32.totalorder %s35, 0
  %s37 = scalar_select %p36, %s35, 0
  %s38 = smul.u32 2, %s37
  %p39 = scmp.lt.s32.totalorder %s38, 1
  %s40 = scalar_select %p39, %s38, 1
  %s41 = smul.addr %s40, 8
  %s42 = scalar_lea.vmem %s0, %s41
  %s43 = sadd.s32 0, 0
  %p44 = scmp.lt.s32.totalorder %s43, 0
  %s45 = scalar_select %p44, %s43, 0
  %s46 = smul.u32 2, %s45
  %p47 = scmp.lt.s32.totalorder %s46, 1
  %s48 = scalar_select %p47, %s46, 1
  %s49 = smul.addr %s48, 8
  %s50 = scalar_lea.vmem %s1, %s49
  %s51 = sadd.s32 0, 0
  %p52 = scmp.lt.s32.totalorder %s51, 0
  %s53 = scalar_select %p52, %s51, 0
  %s54 = smul.u32 2, %s53
  %p55 = scmp.lt.s32.totalorder %s54, 1
  %s56 = scalar_select %p55, %s54, 1
  %s57 = smul.addr %s56, 8
  %s58 = scalar_lea.vmem %s0, %s57
  %s59 = sadd.s32 0, 0
  %p60 = scmp.lt.s32.totalorder %s59, 0
  %s61 = scalar_select %p60, %s59, 0
  %s62 = smul.u32 2, %s61
  %s63 = sadd.s32 0, 0
  %p64 = scmp.lt.s32.totalorder %s63, 0
  %s65 = scalar_select %p64, %s63, 0
  %s66 = smul.u32 2, %s65
  %p67 = scmp.lt.s32.totalorder %s66, 1
  %s68 = scalar_select %p67, %s66, 1
  %s69 = smul.addr %s68, 8
  %s70 = scalar_lea.vmem %s1, %s69
  %s71 = sadd.s32 0, 0
  %p72 = scmp.lt.s32.totalorder %s71, 0
  %s73 = scalar_select %p72, %s71, 0
  %s74 = smul.u32 2, %s73
  %p75 = scmp.eq.s32.totalorder 0, 0
  // Predicated region
  $region10: #{bce_dice_loss.1} parent=0 // pred_check
    %p76 = pneg %p75
  $region11: #{bce_dice_loss.1} parent=0 // pred_check_branch
    %78 = sbr.rel (%p76) target = $region13
  $region12: #{bce_dice_loss.1} parent=0 // pred_region
    %79 = vst [vmem:[%s2] sm:$0xff] 0.0
    %80 = vst [vmem:[%s2 + $0x8] sm:$0xff] 0.0
    %81 = vst [vmem:[%s2 + $0x10] sm:$0xff] 0.0
    %82 = vst [vmem:[%s2 + $0x18] sm:$0xff] 0.0
  $region13: #{bce_dice_loss.1} parent=0 // pred_fallthru
    _
  %s83 = sadd.s32 0, 0
  %s84 = smul.u32 %s83, 16
  %s85 = sadd.s32 %s84, 16
  %p86 = scmp.le.s32.totalorder %s85, 16
  // Predicated region
  $region14: #{bce_dice_loss.1} parent=0 // pred_check
    %p87 = pneg %p86
  $region15: #{bce_dice_loss.1} parent=0 // pred_check_branch
    %89 = sbr.rel (%p87) target = $region17
  $region16: #{bce_dice_loss.1} parent=0 // pred_region
    %v90 = vld [vmem:[%s58] sm:$0xff]
    %v91 = vld [vmem:[%s58 + $0x8] sm:$0xff]
    %v92 = vld [vmem:[%s70] sm:$0xff]
    %v93 = vld [vmem:[%s70 + $0x8] sm:$0xff]
    %v94 = vand.u32 2147483647, %v90
    %v95 = vand.u32 2147483647, %v91
    %v96 = vsub.f32 0.0, %v94
    %v97 = vsub.f32 0.0, %v95
    %v98 = vmul.f32 %v96, 1.442695
    %v99 = vpow.pop %v98
    %v100 = vmul.f32 %v97, 1.442695
    %v101 = vpow.pop %v100
    %v102 = vadd.f32 %v99, 1.0
    %v103 = vadd.f32 %v101, 1.0
    %v104 = vrcp.pop %v102
    %v105 = vrcp.pop %v103
    %vm106 = vcmp.ge.f32.partialorder %v90, 0.0
    %vm107 = vcmp.ge.f32.partialorder %v91, 0.0
    %v108 = vmul.f32 %v99, %v104
    %v109 = vmul.f32 %v101, %v105
    %v110 = vsel %vm106, %v104, %v108
    %v111 = vsel %vm107, %v105, %v109
    %v112 = vmax.f32 %v90, 0.0
    %v113 = vmax.f32 %v91, 0.0
    %v114 = vmul.f32 %v90, %v92
    %v115 = vmul.f32 %v91, %v93
    %v116 = vsub.f32 %v112, %v114
    %v117 = vsub.f32 %v113, %v115
    %v118 = vlog2.pop %v102
    %v119 = vmul.f32 %v118, 0.6931472
    %v120 = vlog2.pop %v103
    %v121 = vmul.f32 %v120, 0.6931472
    %v122 = vadd.f32 %v116, %v119
    %v123 = vadd.f32 %v117, %v121
    %v124 = vld [vmem:[%s2] sm:$0xff]
    %v125 = vmul.f32 %v110, %v92
    %v126 = vmul.f32 %v111, %v93
    %v127 = vadd.f32 %v125, %v126
    %v128 = vadd.f32 %v124, %v127
    %129 = vst [vmem:[%s2] sm:$0xff] %v128
    %s130 = scalar_lea.vmem %s2, 8
    %v131 = vld [vmem:[%s130] sm:$0xff]
    %v132 = vadd.f32 %v110, %v111
    %v133 = vadd.f32 %v131, %v132
    %134 = vst [vmem:[%s130] sm:$0xff] %v133
    %s135 = scalar_lea.vmem %s2, 16
    %v136 = vld [vmem:[%s135] sm:$0xff]
    %v137 = vadd.f32 %v92, %v93
    %v138 = vadd.f32 %v136, %v137
    %139 = vst [vmem:[%s135] sm:$0xff] %v138
    %s140 = scalar_lea.vmem %s2, 24
    %v141 = vld [vmem:[%s140] sm:$0xff]
    %v142 = vadd.f32 %v122, %v123
    %v143 = vadd.f32 %v141, %v142
    %144 = vst [vmem:[%s140] sm:$0xff] %v143
  $region17: #{bce_dice_loss.1} parent=0 // pred_fallthru
    _
  %p145 = scmp.gt.s32.totalorder %s85, 16
  // Predicated region
  $region18: #{bce_dice_loss.1} parent=0 // pred_check
    %p146 = pneg %p145
  $region19: #{bce_dice_loss.1} parent=0 // pred_check_branch
    %148 = sbr.rel (%p146) target = $region21
  $region20: #{bce_dice_loss.1} parent=0 // pred_region
    %v149 = vld [vmem:[%s58] sm:$0xff]
    %v150 = vld [vmem:[%s58 + $0x8] sm:$0xff]
    %v151 = vld [vmem:[%s70] sm:$0xff]
    %v152 = vld [vmem:[%s70 + $0x8] sm:$0xff]
    %v153 = vlaneseq
    %v154 = vshrl.u32 %v153, 7
    %v155 = vadd.s32 %v154, 8
    %v156 = vstv %s84
    %v157 = vadd.s32 %v154, %v156
    %v158 = vadd.s32 %v155, %v156
    %vm159 = vcmp.lt.s32.totalorder %v157, 16
    %vm160 = vcmp.lt.s32.totalorder %v158, 16
    %v161 = vsel %vm159, %v149, -10000.0
    %v162 = vsel %vm160, %v150, -10000.0
    %v163 = vsel %vm159, %v151, 0.0
    %v164 = vsel %vm160, %v152, 0.0
    %v165 = vand.u32 2147483647, %v161
    %v166 = vand.u32 2147483647, %v162
    %v167 = vsub.f32 0.0, %v165
    %v168 = vsub.f32 0.0, %v166
    %v169 = vmul.f32 %v167, 1.442695
    %v170 = vpow.pop %v169
    %v171 = vmul.f32 %v168, 1.442695
    %v172 = vpow.pop %v171
    %v173 = vadd.f32 %v170, 1.0
    %v174 = vadd.f32 %v172, 1.0
    %v175 = vrcp.pop %v173
    %v176 = vrcp.pop %v174
    %vm177 = vcmp.ge.f32.partialorder %v161, 0.0
    %vm178 = vcmp.ge.f32.partialorder %v162, 0.0
    %v179 = vmul.f32 %v170, %v175
    %v180 = vmul.f32 %v172, %v176
    %v181 = vsel %vm177, %v175, %v179
    %v182 = vsel %vm178, %v176, %v180
    %v183 = vmax.f32 %v161, 0.0
    %v184 = vmax.f32 %v162, 0.0
    %v185 = vmul.f32 %v161, %v163
    %v186 = vmul.f32 %v162, %v164
    %v187 = vsub.f32 %v183, %v185
    %v188 = vsub.f32 %v184, %v186
    %v189 = vlog2.pop %v173
    %v190 = vmul.f32 %v189, 0.6931472
    %v191 = vlog2.pop %v174
    %v192 = vmul.f32 %v191, 0.6931472
    %v193 = vadd.f32 %v187, %v190
    %v194 = vadd.f32 %v188, %v192
    %v195 = vld [vmem:[%s2] sm:$0xff]
    %v196 = vmul.f32 %v181, %v163
    %v197 = vmul.f32 %v182, %v164
    %v198 = vadd.f32 %v196, %v197
    %v199 = vadd.f32 %v195, %v198
    %200 = vst [vmem:[%s2] sm:$0xff] %v199
    %s201 = scalar_lea.vmem %s2, 8
    %v202 = vld [vmem:[%s201] sm:$0xff]
    %v203 = vadd.f32 %v181, %v182
    %v204 = vadd.f32 %v202, %v203
    %205 = vst [vmem:[%s201] sm:$0xff] %v204
    %s206 = scalar_lea.vmem %s2, 16
    %v207 = vld [vmem:[%s206] sm:$0xff]
    %v208 = vadd.f32 %v163, %v164
    %v209 = vadd.f32 %v207, %v208
    %210 = vst [vmem:[%s206] sm:$0xff] %v209
    %s211 = scalar_lea.vmem %s2, 24
    %v212 = vld [vmem:[%s211] sm:$0xff]
    %v213 = vadd.f32 %v193, %v194
    %v214 = vadd.f32 %v212, %v213
    %215 = vst [vmem:[%s211] sm:$0xff] %v214
  $region21: #{bce_dice_loss.1} parent=0 // pred_fallthru
    _
  // Predicated region
  $region22: #{bce_dice_loss.1} parent=0 // pred_check
    _
  $region23: #{bce_dice_loss.1} parent=0 // pred_check_branch
    %217 = sbr.rel (0) target = $region25
  $region24: #{bce_dice_loss.1} parent=0 // pred_region
    _
  $region25: #{bce_dice_loss.1} parent=0 // pred_fallthru
    _
  // Predicated region
  $region26: #{bce_dice_loss.1} parent=0 // pred_check
    _
  $region27: #{bce_dice_loss.1} parent=0 // pred_check_branch
    %219 = sbr.rel (0) target = $region29
  $region28: #{bce_dice_loss.1} parent=0 // pred_region
    _
  $region29: #{bce_dice_loss.1} parent=0 // pred_fallthru
    _

</llo_original>
